<compile_context>
chip_gen: v5e
topology: v5e:2x2
jax: 0.10.0
libtpu: 0.0.40
codegen_flags: <defaults>
</compile_context>

<pallas_src>
import functools

import jax
import jax.numpy as jnp
from jax import lax
from jax.experimental import pallas as pl
from jax.experimental.pallas import tpu as pltpu


def _mtcut_partials_kernel(pred_ref, rerank_ref, cut_ref, labels_ref, out_ref,
                           *, tau):
    labels = labels_ref[...].astype(jnp.float32)   # (TB, S) binary relevance
    pred = pred_ref[...].astype(jnp.float32)       # (TB, S) probs in (0, 1)
    rerank = rerank_ref[...].astype(jnp.float32)   # (TB, S) ranking scores
    cut = cut_ref[...].astype(jnp.float32)         # (TB, S) prob. dist per row

    _, S = labels.shape

    # ------------- prefix sum of relevance along the ranked list ------------
    # Hillis-Steele scan: log2(S) roll+add steps on the XLU slot instead of a
    # dense (S,S) triangular matmul (O(S^2) VMEM + MXU FLOPs).
    col = lax.broadcasted_iota(jnp.int32, (1, S), 1)          # (1, S)
    prefix = labels
    shift = 1
    while shift < S:                                           # static unroll
        shifted = pltpu.roll(prefix, shift=shift, axis=1)      # x[j - shift]
        prefix = prefix + jnp.where(col >= shift, shifted, 0.0)
        shift *= 2

    total_rel = jnp.sum(labels, axis=1, keepdims=True)         # (TB, 1)
    k = col.astype(jnp.float32) + 1.0                          # (1, S) cut pos
    # F1@k = 2 * hits@k / (k + total_relevant); denominator >= 1 always.
    r = (2.0 * prefix) * pl.reciprocal(k + total_rel, approx=True)

    # ------------- q = softmax(r / tau); log q computed analytically --------
    z = r * jnp.float32(1.0 / tau)                             # r in [0,1] -> no overflow
    ez = jnp.exp(z)
    sz = jnp.sum(ez, axis=1, keepdims=True)                    # (TB, 1)
    q = ez * pl.reciprocal(sz, approx=True)
    log_q = z - jnp.log(sz)

    # ------------- JS divergence partial sum (batchmean KLDiv pair) ---------
    m = 0.5 * (cut + q)                                        # > 0 since q > 0
    log_m = jnp.log(m)
    term_q = q * (log_q - log_m)
    # xlogy semantics: zero targets contribute 0 (matches torch KLDivLoss).
    term_p = jnp.where(cut > 0.0, cut * (jnp.log(cut) - log_m), 0.0)
    js_sum = jnp.sum(term_q + term_p)

    # ------------- Rerank partial sums (binary labels assumed) --------------
    pos = (labels == 1.0).astype(jnp.float32)
    neg = 1.0 - pos
    sum_pos = jnp.sum(pos * rerank)
    sum_neg = jnp.sum(neg * rerank)
    n_pos = jnp.sum(pos)
    n_neg = jnp.sum(neg)

    # ------------- BCE partial sum (log clamped at -100, like torch) --------
    log_p = jnp.maximum(jnp.log(pred), -100.0)
    log_1mp = jnp.maximum(jnp.log(1.0 - pred), -100.0)
    bce_sum = -jnp.sum(labels * log_p + (1.0 - labels) * log_1mp)

    # ------------- write 6 per-tile partial scalars, lane-dense block -------
    lane = lax.broadcasted_iota(jnp.int32, (8, 128), 1)
    sub = lax.broadcasted_iota(jnp.int32, (8, 128), 0)
    block = jnp.zeros((8, 128), jnp.float32)
    for i, v in enumerate((js_sum, sum_pos, sum_neg, n_pos, n_neg, bce_sum)):
        block = jnp.where((sub == 0) & (lane == i), v, block)
    out_ref[0, :, :] = block


def _pick_tb(batch, seq, itemsize):
    """Largest batch tile that keeps 4 double-buffered input tiles + f32
    temporaries comfortably under the default scoped VMEM on all generations."""
    cap = max(8, (512 * 1024) // max(seq * itemsize, 1))   # ~512 KiB per input tile
    if batch <= cap:
        return batch                                       # full-extent block OK
    best = None
    tb = 8
    while tb <= cap:                                       # multiple-of-8 divisor
        if batch % tb == 0:
            best = tb
        tb += 8
    return best if best is not None else batch


def mtcut_loss(pred_y, rerank_y, cut_y, labels, *,
               tau=0.85, margin=0.0005, rerank_weight=0.5, classi_weight=0.5):
    """pred_y/rerank_y/cut_y: (B, S, 1) float; labels: (B, S) float {0,1}.

    Inputs are kept in their native dtype (no wrapper f32 copies); the kernel
    casts per tile.  The trailing singleton squeeze is a metadata-only reshape.
    """
    squeeze = lambda x: x.reshape(x.shape[0], x.shape[1]) if x.ndim == 3 else x
    pred = squeeze(pred_y)
    rerank = squeeze(rerank_y)
    cut = squeeze(cut_y)
    labels2 = squeeze(labels)
    B, S = labels2.shape

    itemsize = max(jnp.dtype(x.dtype).itemsize for x in (pred, rerank, cut, labels2))
    TB = _pick_tb(B, S, itemsize)
    nb = B // TB

    kernel = functools.partial(_mtcut_partials_kernel, tau=float(tau))

    partials = pl.pallas_call(
        kernel,
        out_shape=jax.ShapeDtypeStruct((nb, 8, 128), jnp.float32),
        grid=(nb,),
        in_specs=[pl.BlockSpec((TB, S), lambda i: (i, 0)) for _ in range(4)],
        out_specs=pl.BlockSpec((1, 8, 128), lambda i: (i, 0, 0)),
        compiler_params=pltpu.CompilerParams(
            dimension_semantics=("parallel",),          # megacore-friendly on v7x
            vmem_limit_bytes=32 * 1024 * 1024),
    )(pred, rerank, cut, labels2)

    # Tiny scalar finalization in XLA: all reductions are batch-additive.
    totals = jnp.sum(partials[:, 0, :], axis=0)          # (128,)
    js_sum = totals[0]
    sum_pos, sum_neg = totals[1], totals[2]
    n_pos, n_neg = totals[3], totals[4]
    bce_sum = totals[5]

    cutloss = js_sum / (2.0 * B)                         # (KL_q + KL_p)/2, batchmean
    pos_mean = sum_pos / jnp.maximum(n_pos, 1.0)
    neg_mean = sum_neg / jnp.maximum(n_neg, 1.0)
    hinge = jnp.maximum(jnp.float32(0.0), neg_mean - pos_mean + jnp.float32(margin))
    rerankloss = jnp.where((n_pos > 0.0) & (n_neg > 0.0), hinge, 0.0)
    bce = bce_sum / jnp.float32(B * S)
    return cutloss + rerank_weight * rerankloss + classi_weight * bce


if __name__ == "__main__":
    B, S = 8, 128
    key = jax.random.PRNGKey(0)
    k_w, k_pred, k_rerank, k_cut, k_lab = jax.random.split(key, 5)

    # nn.Parameter(t.randn(num_tasks)) from __init__ — deterministic init.
    # TODO(synk): `self.weights` is never used in MtCutLoss.forward, so it does
    # not enter the kernel; kept here only for parity with the module's state.
    _task_weights = jax.random.normal(k_w, (3,), dtype=jnp.float32)

    # pred_y: per-position relevance probabilities in (0, 1)
    pred_y = jax.nn.sigmoid(jax.random.normal(k_pred, (B, S, 1), jnp.float32))
    # rerank_y: raw ranking scores
    rerank_y = jax.random.normal(k_rerank, (B, S, 1), jnp.float32)
    # cut_y: probability distribution over cut positions (softmax per row)
    cut_y = jax.nn.softmax(
        jax.random.normal(k_cut, (B, S), jnp.float32), axis=1)[..., None]
    # binary relevance labels; guarantee both classes present (RerankLoss branch)
    labels = (jax.random.uniform(k_lab, (B, S)) < 0.3).astype(jnp.float32)
    labels = labels.at[:, 0].set(1.0).at[:, 1].set(0.0)

    loss = mtcut_loss(pred_y, rerank_y, cut_y, labels)
    jax.block_until_ready(loss)
    assert loss.shape == () and bool(jnp.isfinite(loss))
    print("KERNEL_OK")
</pallas_src>

<mosaic_0001>
module attributes {stable_mosaic.version = 11 : i64} {
  func.func @_mtcut_partials_kernel(%arg0: i32, %arg1: memref<8x128xf32, #tpu.memory_space<vmem>>, %arg2: memref<8x128xf32, #tpu.memory_space<vmem>>, %arg3: memref<8x128xf32, #tpu.memory_space<vmem>>, %arg4: memref<8x128xf32, #tpu.memory_space<vmem>>, %arg5: memref<1x8x128xf32, #tpu.memory_space<vmem>>) attributes {dimension_semantics = [#tpu.dimension_semantics<parallel>], iteration_bounds = array<i64: 1>, scalar_prefetch = 0 : i64, scratch_operands = 0 : i64, tpu.core_type = #tpu.core_type<tc>, window_params = [{transform_indices = @transform_0, window_bounds = array<i64: 8, 128>}, {transform_indices = @transform_1, window_bounds = array<i64: 8, 128>}, {transform_indices = @transform_2, window_bounds = array<i64: 8, 128>}, {transform_indices = @transform_3, window_bounds = array<i64: 8, 128>}, {transform_indices = @transform_4, window_bounds = array<i64: 1, 8, 128>}]} {
    %c0 = arith.constant 0 : index
    %c0_0 = arith.constant 0 : index
    %0 = vector.load %arg4[%c0, %c0_0] : memref<8x128xf32, #tpu.memory_space<vmem>>, vector<8x128xf32>
    %c0_1 = arith.constant 0 : index
    %c0_2 = arith.constant 0 : index
    %1 = vector.load %arg1[%c0_1, %c0_2] : memref<8x128xf32, #tpu.memory_space<vmem>>, vector<8x128xf32>
    %c0_3 = arith.constant 0 : index
    %c0_4 = arith.constant 0 : index
    %2 = vector.load %arg2[%c0_3, %c0_4] : memref<8x128xf32, #tpu.memory_space<vmem>>, vector<8x128xf32>
    %c0_5 = arith.constant 0 : index
    %c0_6 = arith.constant 0 : index
    %3 = vector.load %arg3[%c0_5, %c0_6] : memref<8x128xf32, #tpu.memory_space<vmem>>, vector<8x128xf32>
    %4 = tpu.iota {dimensions = array<i32: 1>} : vector<1x128xi32>
    %c1_i32 = arith.constant 1 : i32
    %5 = tpu.dynamic_rotate %0 by %c1_i32 dim 1 : vector<8x128xf32>, i32 -> vector<8x128xf32>
    %c1_i32_7 = arith.constant 1 : i32
    %6 = vector.broadcast %c1_i32_7 : i32 to vector<1x128xi32>
    %7 = arith.cmpi sge, %4, %6 : vector<1x128xi32>
    %cst = arith.constant 0.000000e+00 : f32
    %8 = vector.shape_cast %7 : vector<1x128xi1> to vector<1x128xi1>
    %9 = vector.broadcast %8 : vector<1x128xi1> to vector<8x128xi1>
    %10 = vector.broadcast %cst : f32 to vector<8x128xf32>
    %11 = arith.select %9, %5, %10 : vector<8x128xi1>, vector<8x128xf32>
    %12 = arith.addf %0, %11 : vector<8x128xf32>
    %c2_i32 = arith.constant 2 : i32
    %13 = tpu.dynamic_rotate %12 by %c2_i32 dim 1 : vector<8x128xf32>, i32 -> vector<8x128xf32>
    %c2_i32_8 = arith.constant 2 : i32
    %14 = vector.broadcast %c2_i32_8 : i32 to vector<1x128xi32>
    %15 = arith.cmpi sge, %4, %14 : vector<1x128xi32>
    %cst_9 = arith.constant 0.000000e+00 : f32
    %16 = vector.shape_cast %15 : vector<1x128xi1> to vector<1x128xi1>
    %17 = vector.broadcast %16 : vector<1x128xi1> to vector<8x128xi1>
    %18 = vector.broadcast %cst_9 : f32 to vector<8x128xf32>
    %19 = arith.select %17, %13, %18 : vector<8x128xi1>, vector<8x128xf32>
    %20 = arith.addf %12, %19 : vector<8x128xf32>
    %c4_i32 = arith.constant 4 : i32
    %21 = tpu.dynamic_rotate %20 by %c4_i32 dim 1 : vector<8x128xf32>, i32 -> vector<8x128xf32>
    %c4_i32_10 = arith.constant 4 : i32
    %22 = vector.broadcast %c4_i32_10 : i32 to vector<1x128xi32>
    %23 = arith.cmpi sge, %4, %22 : vector<1x128xi32>
    %cst_11 = arith.constant 0.000000e+00 : f32
    %24 = vector.shape_cast %23 : vector<1x128xi1> to vector<1x128xi1>
    %25 = vector.broadcast %24 : vector<1x128xi1> to vector<8x128xi1>
    %26 = vector.broadcast %cst_11 : f32 to vector<8x128xf32>
    %27 = arith.select %25, %21, %26 : vector<8x128xi1>, vector<8x128xf32>
    %28 = arith.addf %20, %27 : vector<8x128xf32>
    %c8_i32 = arith.constant 8 : i32
    %29 = tpu.dynamic_rotate %28 by %c8_i32 dim 1 : vector<8x128xf32>, i32 -> vector<8x128xf32>
    %c8_i32_12 = arith.constant 8 : i32
    %30 = vector.broadcast %c8_i32_12 : i32 to vector<1x128xi32>
    %31 = arith.cmpi sge, %4, %30 : vector<1x128xi32>
    %cst_13 = arith.constant 0.000000e+00 : f32
    %32 = vector.shape_cast %31 : vector<1x128xi1> to vector<1x128xi1>
    %33 = vector.broadcast %32 : vector<1x128xi1> to vector<8x128xi1>
    %34 = vector.broadcast %cst_13 : f32 to vector<8x128xf32>
    %35 = arith.select %33, %29, %34 : vector<8x128xi1>, vector<8x128xf32>
    %36 = arith.addf %28, %35 : vector<8x128xf32>
    %c16_i32 = arith.constant 16 : i32
    %37 = tpu.dynamic_rotate %36 by %c16_i32 dim 1 : vector<8x128xf32>, i32 -> vector<8x128xf32>
    %c16_i32_14 = arith.constant 16 : i32
    %38 = vector.broadcast %c16_i32_14 : i32 to vector<1x128xi32>
    %39 = arith.cmpi sge, %4, %38 : vector<1x128xi32>
    %cst_15 = arith.constant 0.000000e+00 : f32
    %40 = vector.shape_cast %39 : vector<1x128xi1> to vector<1x128xi1>
    %41 = vector.broadcast %40 : vector<1x128xi1> to vector<8x128xi1>
    %42 = vector.broadcast %cst_15 : f32 to vector<8x128xf32>
    %43 = arith.select %41, %37, %42 : vector<8x128xi1>, vector<8x128xf32>
    %44 = arith.addf %36, %43 : vector<8x128xf32>
    %c32_i32 = arith.constant 32 : i32
    %45 = tpu.dynamic_rotate %44 by %c32_i32 dim 1 : vector<8x128xf32>, i32 -> vector<8x128xf32>
    %c32_i32_16 = arith.constant 32 : i32
    %46 = vector.broadcast %c32_i32_16 : i32 to vector<1x128xi32>
    %47 = arith.cmpi sge, %4, %46 : vector<1x128xi32>
    %cst_17 = arith.constant 0.000000e+00 : f32
    %48 = vector.shape_cast %47 : vector<1x128xi1> to vector<1x128xi1>
    %49 = vector.broadcast %48 : vector<1x128xi1> to vector<8x128xi1>
    %50 = vector.broadcast %cst_17 : f32 to vector<8x128xf32>
    %51 = arith.select %49, %45, %50 : vector<8x128xi1>, vector<8x128xf32>
    %52 = arith.addf %44, %51 : vector<8x128xf32>
    %c64_i32 = arith.constant 64 : i32
    %53 = tpu.dynamic_rotate %52 by %c64_i32 dim 1 : vector<8x128xf32>, i32 -> vector<8x128xf32>
    %c64_i32_18 = arith.constant 64 : i32
    %54 = vector.broadcast %c64_i32_18 : i32 to vector<1x128xi32>
    %55 = arith.cmpi sge, %4, %54 : vector<1x128xi32>
    %cst_19 = arith.constant 0.000000e+00 : f32
    %56 = vector.shape_cast %55 : vector<1x128xi1> to vector<1x128xi1>
    %57 = vector.broadcast %56 : vector<1x128xi1> to vector<8x128xi1>
    %58 = vector.broadcast %cst_19 : f32 to vector<8x128xf32>
    %59 = arith.select %57, %53, %58 : vector<8x128xi1>, vector<8x128xf32>
    %60 = arith.addf %52, %59 : vector<8x128xf32>
    %cst_20 = arith.constant dense<0.000000e+00> : vector<8xf32>
    %61 = vector.multi_reduction <add>, %0, %cst_20 [1] : vector<8x128xf32> to vector<8xf32>
    %62 = vector.shape_cast %61 : vector<8xf32> to vector<8x1xf32>
    %63 = arith.sitofp %4 : vector<1x128xi32> to vector<1x128xf32>
    %cst_21 = arith.constant 1.000000e+00 : f32
    %64 = vector.broadcast %cst_21 : f32 to vector<1x128xf32>
    %65 = arith.addf %63, %64 : vector<1x128xf32>
    %cst_22 = arith.constant 2.000000e+00 : f32
    %66 = vector.broadcast %cst_22 : f32 to vector<8x128xf32>
    %67 = arith.mulf %66, %60 : vector<8x128xf32>
    %68 = vector.broadcast %65 : vector<1x128xf32> to vector<8x128xf32>
    %69 = vector.broadcast %62 : vector<8x1xf32> to vector<8x128xf32>
    %70 = arith.addf %68, %69 : vector<8x128xf32>
    %71 = tpu.reciprocal %70 {approx = true} : vector<8x128xf32> -> vector<8x128xf32>
    %72 = arith.mulf %67, %71 : vector<8x128xf32>
    %cst_23 = arith.constant 1.17647064 : f32
    %73 = vector.broadcast %cst_23 : f32 to vector<8x128xf32>
    %74 = arith.mulf %72, %73 : vector<8x128xf32>
    %75 = math.exp %74 : vector<8x128xf32>
    %cst_24 = arith.constant dense<0.000000e+00> : vector<8xf32>
    %76 = vector.multi_reduction <add>, %75, %cst_24 [1] : vector<8x128xf32> to vector<8xf32>
    %77 = vector.shape_cast %76 : vector<8xf32> to vector<8x1xf32>
    %78 = tpu.reciprocal %77 {approx = true} : vector<8x1xf32> -> vector<8x1xf32>
    %79 = vector.broadcast %78 : vector<8x1xf32> to vector<8x128xf32>
    %80 = arith.mulf %75, %79 : vector<8x128xf32>
    %81 = math.log %77 : vector<8x1xf32>
    %82 = vector.broadcast %81 : vector<8x1xf32> to vector<8x128xf32>
    %83 = arith.subf %74, %82 : vector<8x128xf32>
    %84 = arith.addf %3, %80 : vector<8x128xf32>
    %cst_25 = arith.constant 5.000000e-01 : f32
    %85 = vector.broadcast %cst_25 : f32 to vector<8x128xf32>
    %86 = arith.mulf %85, %84 : vector<8x128xf32>
    %87 = math.log %86 : vector<8x128xf32>
    %88 = arith.subf %83, %87 : vector<8x128xf32>
    %89 = arith.mulf %80, %88 : vector<8x128xf32>
    %cst_26 = arith.constant 0.000000e+00 : f32
    %90 = vector.broadcast %cst_26 : f32 to vector<8x128xf32>
    %91 = arith.cmpf ogt, %3, %90 : vector<8x128xf32>
    %92 = math.log %3 : vector<8x128xf32>
    %93 = arith.subf %92, %87 : vector<8x128xf32>
    %94 = arith.mulf %3, %93 : vector<8x128xf32>
    %cst_27 = arith.constant 0.000000e+00 : f32
    %95 = vector.broadcast %cst_27 : f32 to vector<8x128xf32>
    %96 = arith.select %91, %94, %95 : vector<8x128xi1>, vector<8x128xf32>
    %97 = arith.addf %89, %96 : vector<8x128xf32>
    %98 = vector.shape_cast %97 : vector<8x128xf32> to vector<1x8x128xf32>
    %cst_28 = arith.constant dense<0.000000e+00> : vector<1xf32>
    %99 = vector.multi_reduction <add>, %98, %cst_28 [1, 2] : vector<1x8x128xf32> to vector<1xf32>
    %100 = vector.shape_cast %99 : vector<1xf32> to vector<1x1x1xf32>
    %101 = vector.extract %100[0, 0, 0] : f32 from vector<1x1x1xf32>
    %cst_29 = arith.constant 1.000000e+00 : f32
    %102 = vector.broadcast %cst_29 : f32 to vector<8x128xf32>
    %103 = arith.cmpf oeq, %0, %102 : vector<8x128xf32>
    %104 = arith.extui %103 : vector<8x128xi1> to vector<8x128xi32>
    %105 = arith.sitofp %104 : vector<8x128xi32> to vector<8x128xf32>
    %cst_30 = arith.constant 1.000000e+00 : f32
    %106 = vector.broadcast %cst_30 : f32 to vector<8x128xf32>
    %107 = arith.subf %106, %105 : vector<8x128xf32>
    %108 = arith.mulf %105, %2 : vector<8x128xf32>
    %109 = vector.shape_cast %108 : vector<8x128xf32> to vector<1x8x128xf32>
    %cst_31 = arith.constant dense<0.000000e+00> : vector<1xf32>
    %110 = vector.multi_reduction <add>, %109, %cst_31 [1, 2] : vector<1x8x128xf32> to vector<1xf32>
    %111 = vector.shape_cast %110 : vector<1xf32> to vector<1x1x1xf32>
    %112 = vector.extract %111[0, 0, 0] : f32 from vector<1x1x1xf32>
    %113 = arith.mulf %107, %2 : vector<8x128xf32>
    %114 = vector.shape_cast %113 : vector<8x128xf32> to vector<1x8x128xf32>
    %cst_32 = arith.constant dense<0.000000e+00> : vector<1xf32>
    %115 = vector.multi_reduction <add>, %114, %cst_32 [1, 2] : vector<1x8x128xf32> to vector<1xf32>
    %116 = vector.shape_cast %115 : vector<1xf32> to vector<1x1x1xf32>
    %117 = vector.extract %116[0, 0, 0] : f32 from vector<1x1x1xf32>
    %118 = vector.shape_cast %105 : vector<8x128xf32> to vector<1x8x128xf32>
    %cst_33 = arith.constant dense<0.000000e+00> : vector<1xf32>
    %119 = vector.multi_reduction <add>, %118, %cst_33 [1, 2] : vector<1x8x128xf32> to vector<1xf32>
    %120 = vector.shape_cast %119 : vector<1xf32> to vector<1x1x1xf32>
    %121 = vector.extract %120[0, 0, 0] : f32 from vector<1x1x1xf32>
    %122 = vector.shape_cast %107 : vector<8x128xf32> to vector<1x8x128xf32>
    %cst_34 = arith.constant dense<0.000000e+00> : vector<1xf32>
    %123 = vector.multi_reduction <add>, %122, %cst_34 [1, 2] : vector<1x8x128xf32> to vector<1xf32>
    %124 = vector.shape_cast %123 : vector<1xf32> to vector<1x1x1xf32>
    %125 = vector.extract %124[0, 0, 0] : f32 from vector<1x1x1xf32>
    %126 = math.log %1 : vector<8x128xf32>
    %cst_35 = arith.constant -1.000000e+02 : f32
    %127 = vector.broadcast %cst_35 : f32 to vector<8x128xf32>
    %128 = arith.maximumf %126, %127 : vector<8x128xf32>
    %cst_36 = arith.constant 1.000000e+00 : f32
    %129 = vector.broadcast %cst_36 : f32 to vector<8x128xf32>
    %130 = arith.subf %129, %1 : vector<8x128xf32>
    %131 = math.log %130 : vector<8x128xf32>
    %cst_37 = arith.constant -1.000000e+02 : f32
    %132 = vector.broadcast %cst_37 : f32 to vector<8x128xf32>
    %133 = arith.maximumf %131, %132 : vector<8x128xf32>
    %134 = arith.mulf %0, %128 : vector<8x128xf32>
    %cst_38 = arith.constant 1.000000e+00 : f32
    %135 = vector.broadcast %cst_38 : f32 to vector<8x128xf32>
    %136 = arith.subf %135, %0 : vector<8x128xf32>
    %137 = arith.mulf %136, %133 : vector<8x128xf32>
    %138 = arith.addf %134, %137 : vector<8x128xf32>
    %139 = vector.shape_cast %138 : vector<8x128xf32> to vector<1x8x128xf32>
    %cst_39 = arith.constant dense<0.000000e+00> : vector<1xf32>
    %140 = vector.multi_reduction <add>, %139, %cst_39 [1, 2] : vector<1x8x128xf32> to vector<1xf32>
    %141 = vector.shape_cast %140 : vector<1xf32> to vector<1x1x1xf32>
    %142 = vector.extract %141[0, 0, 0] : f32 from vector<1x1x1xf32>
    %cst_40 = arith.constant 0.000000e+00 : f32
    %143 = arith.subf %cst_40, %142 : f32
    %144 = tpu.iota {dimensions = array<i32: 1>} : vector<8x128xi32>
    %145 = tpu.iota {dimensions = array<i32: 0>} : vector<8x128xi32>
    %cst_41 = arith.constant 0.000000e+00 : f32
    %146 = vector.broadcast %cst_41 : f32 to vector<8x128xf32>
    %c0_i32 = arith.constant 0 : i32
    %147 = vector.broadcast %c0_i32 : i32 to vector<8x128xi32>
    %148 = arith.cmpi eq, %145, %147 : vector<8x128xi32>
    %c0_i32_42 = arith.constant 0 : i32
    %149 = vector.broadcast %c0_i32_42 : i32 to vector<8x128xi32>
    %150 = arith.cmpi eq, %144, %149 : vector<8x128xi32>
    %151 = arith.andi %148, %150 : vector<8x128xi1>
    %152 = vector.broadcast %101 : f32 to vector<8x128xf32>
    %153 = arith.select %151, %152, %146 : vector<8x128xi1>, vector<8x128xf32>
    %c0_i32_43 = arith.constant 0 : i32
    %154 = vector.broadcast %c0_i32_43 : i32 to vector<8x128xi32>
    %155 = arith.cmpi eq, %145, %154 : vector<8x128xi32>
    %c1_i32_44 = arith.constant 1 : i32
    %156 = vector.broadcast %c1_i32_44 : i32 to vector<8x128xi32>
    %157 = arith.cmpi eq, %144, %156 : vector<8x128xi32>
    %158 = arith.andi %155, %157 : vector<8x128xi1>
    %159 = vector.broadcast %112 : f32 to vector<8x128xf32>
    %160 = arith.select %158, %159, %153 : vector<8x128xi1>, vector<8x128xf32>
    %c0_i32_45 = arith.constant 0 : i32
    %161 = vector.broadcast %c0_i32_45 : i32 to vector<8x128xi32>
    %162 = arith.cmpi eq, %145, %161 : vector<8x128xi32>
    %c2_i32_46 = arith.constant 2 : i32
    %163 = vector.broadcast %c2_i32_46 : i32 to vector<8x128xi32>
    %164 = arith.cmpi eq, %144, %163 : vector<8x128xi32>
    %165 = arith.andi %162, %164 : vector<8x128xi1>
    %166 = vector.broadcast %117 : f32 to vector<8x128xf32>
    %167 = arith.select %165, %166, %160 : vector<8x128xi1>, vector<8x128xf32>
    %c0_i32_47 = arith.constant 0 : i32
    %168 = vector.broadcast %c0_i32_47 : i32 to vector<8x128xi32>
    %169 = arith.cmpi eq, %145, %168 : vector<8x128xi32>
    %c3_i32 = arith.constant 3 : i32
    %170 = vector.broadcast %c3_i32 : i32 to vector<8x128xi32>
    %171 = arith.cmpi eq, %144, %170 : vector<8x128xi32>
    %172 = arith.andi %169, %171 : vector<8x128xi1>
    %173 = vector.broadcast %121 : f32 to vector<8x128xf32>
    %174 = arith.select %172, %173, %167 : vector<8x128xi1>, vector<8x128xf32>
    %c0_i32_48 = arith.constant 0 : i32
    %175 = vector.broadcast %c0_i32_48 : i32 to vector<8x128xi32>
    %176 = arith.cmpi eq, %145, %175 : vector<8x128xi32>
    %c4_i32_49 = arith.constant 4 : i32
    %177 = vector.broadcast %c4_i32_49 : i32 to vector<8x128xi32>
    %178 = arith.cmpi eq, %144, %177 : vector<8x128xi32>
    %179 = arith.andi %176, %178 : vector<8x128xi1>
    %180 = vector.broadcast %125 : f32 to vector<8x128xf32>
    %181 = arith.select %179, %180, %174 : vector<8x128xi1>, vector<8x128xf32>
    %c0_i32_50 = arith.constant 0 : i32
    %182 = vector.broadcast %c0_i32_50 : i32 to vector<8x128xi32>
    %183 = arith.cmpi eq, %145, %182 : vector<8x128xi32>
    %c5_i32 = arith.constant 5 : i32
    %184 = vector.broadcast %c5_i32 : i32 to vector<8x128xi32>
    %185 = arith.cmpi eq, %144, %184 : vector<8x128xi32>
    %186 = arith.andi %183, %185 : vector<8x128xi1>
    %187 = vector.broadcast %143 : f32 to vector<8x128xf32>
    %188 = arith.select %186, %187, %181 : vector<8x128xi1>, vector<8x128xf32>
    %c0_51 = arith.constant 0 : index
    %c0_52 = arith.constant 0 : index
    %c0_53 = arith.constant 0 : index
    %189 = vector.load %arg5[%c0_51, %c0_52, %c0_53] : memref<1x8x128xf32, #tpu.memory_space<vmem>>, vector<1x8x128xf32>
    %190 = vector.shape_cast %189 : vector<1x8x128xf32> to vector<8x128xf32>
    %191 = vector.shape_cast %188 : vector<8x128xf32> to vector<1x8x128xf32>
    tpu.vector_store %arg5[%c0_51, %c0_52, %c0_53], %191 {strides = array<i32>} : memref<1x8x128xf32, #tpu.memory_space<vmem>>, vector<1x8x128xf32>,
    return
  }
  func.func @transform_0(%arg0: i32) -> (i32, i32) {
    %c0_i32 = arith.constant 0 : i32
    %c0_i32_0 = arith.constant 0 : i32
    return %arg0, %c0_i32 : i32, i32
  }
  func.func @transform_1(%arg0: i32) -> (i32, i32) {
    %c0_i32 = arith.constant 0 : i32
    %c0_i32_0 = arith.constant 0 : i32
    return %arg0, %c0_i32 : i32, i32
  }
  func.func @transform_2(%arg0: i32) -> (i32, i32) {
    %c0_i32 = arith.constant 0 : i32
    %c0_i32_0 = arith.constant 0 : i32
    return %arg0, %c0_i32 : i32, i32
  }
  func.func @transform_3(%arg0: i32) -> (i32, i32) {
    %c0_i32 = arith.constant 0 : i32
    %c0_i32_0 = arith.constant 0 : i32
    return %arg0, %c0_i32 : i32, i32
  }
  func.func @transform_4(%arg0: i32) -> (i32, i32, i32) {
    %c0_i32 = arith.constant 0 : i32
    %c0_i32_0 = arith.constant 0 : i32
    %c0_i32_1 = arith.constant 0 : i32
    return %arg0, %c0_i32, %c0_i32_0 : i32, i32, i32
  }
}

</mosaic_0001>

<llo_original>
// kernel: tpu_custom_call.1
$region0: #{tpu_custom_call.1}
  #allocation0 [shape = 'u32[]', space=smem, size = 0x4, offset = 0x4, fixed_abs, tag = 'smem constant byte address 0x4 - core index']
  #allocation1 [shape = 'u32[72,128]{1,0:T(1,128)}', space=vmem, size = 0x9000, scoped, tag = 'internal scratch']
  %s0 = inlined_call_operand.hbm [shape: f32[8,128], index: 0, kind: input, shape index: {}]
  %s1 = inlined_call_operand.hbm [shape: f32[8,128], index: 1, kind: input, shape index: {}]
  %s2 = inlined_call_operand.hbm [shape: f32[8,128], index: 2, kind: input, shape index: {}]
  %s3 = inlined_call_operand.hbm [shape: f32[8,128], index: 3, kind: input, shape index: {}]
  %s4 = inlined_call_operand.hbm [shape: f32[1,8,128], index: 4, kind: output, shape index: {}]
  %s5 = sld [smem:[#allocation0]]
  $region42: #{tpu_custom_call.1} parent=0
    _
  %s7 = ssub.s32 1, %s5
  %s8 = scalar_select 0, %s7, %s5
  $region1: #{tpu_custom_call.1} parent=0
    #allocation2 [shape = 'u8[4096]{0}', space=vmem, size = 0x1000, scoped, tag = 'input window, operand 0, single buffered']
    #allocation3 [shape = 's32[1]{0}', space=sflag, size = 0x4, scoped, tag = 'scoped memory for tpu_custom_call.1']
    #allocation4 [shape = 's32[1]{0}', space=sflag, size = 0x4, scoped, tag = 'scoped memory for tpu_custom_call.1']
    #allocation5 [shape = 'u8[4096]{0}', space=vmem, size = 0x1000, scoped, tag = 'input window, operand 1, single buffered']
    #allocation6 [shape = 's32[1]{0}', space=sflag, size = 0x4, scoped, tag = 'scoped memory for tpu_custom_call.1']
    #allocation7 [shape = 'u8[4096]{0}', space=vmem, size = 0x1000, scoped, tag = 'input window, operand 2, single buffered']
    #allocation8 [shape = 'u8[4096]{0}', space=vmem, size = 0x1000, scoped, tag = 'input window, operand 3, single buffered']
    #allocation9 [shape = 's32[1]{0}', space=sflag, size = 0x4, scoped, tag = 'scoped memory for tpu_custom_call.1']
    #allocation10 [shape = 'u8[4096]{0}', space=vmem, size = 0x1000, scoped, tag = 'output window, operand 0, single buffered']
    %9 = vsyncpa [#allocation3], 0
    %10 = vsyncpa [#allocation6], 0
    %11 = vsyncpa [#allocation9], 0
    %12 = vsyncpa [#allocation4], 0
    // Predicated region
    $region2: #{tpu_custom_call.1} parent=1 // pred_check
      _
    $region3: #{tpu_custom_call.1} parent=1 // pred_check_branch
      %14 = sbr.rel (0) target = $region5
    $region4: #{tpu_custom_call.1} parent=1 // pred_region
      %16 = vsyncadd [#allocation3], 0
      %s18 = sshll.u32 %s0, 4
      %s19 = int_to_ptr.hbm [resolvable:$true] %s18
      %s20 = sshll.u32 [#allocation2], 4
      %s21 = int_to_ptr.vmem [resolvable:$true] %s20
      %23 = dma.hbm_to_vmem [thread:$0]  %s19, 128, %s21, [#allocation3]
    $region5: #{tpu_custom_call.1} parent=1 // pred_fallthru
      _
    // Predicated region
    $region6: #{tpu_custom_call.1} parent=1 // pred_check
      _
    $region7: #{tpu_custom_call.1} parent=1 // pred_check_branch
      %25 = sbr.rel (0) target = $region9
    $region8: #{tpu_custom_call.1} parent=1 // pred_region
      %27 = vsyncadd [#allocation6], 0
      %s29 = sshll.u32 %s1, 4
      %s30 = int_to_ptr.hbm [resolvable:$true] %s29
      %s31 = sshll.u32 [#allocation5], 4
      %s32 = int_to_ptr.vmem [resolvable:$true] %s31
      %34 = dma.hbm_to_vmem [thread:$0]  %s30, 128, %s32, [#allocation6]
    $region9: #{tpu_custom_call.1} parent=1 // pred_fallthru
      _
    // Predicated region
    $region10: #{tpu_custom_call.1} parent=1 // pred_check
      _
    $region11: #{tpu_custom_call.1} parent=1 // pred_check_branch
      %36 = sbr.rel (0) target = $region13
    $region12: #{tpu_custom_call.1} parent=1 // pred_region
      %38 = vsyncadd [#allocation6], 0
      %s40 = sshll.u32 %s2, 4
      %s41 = int_to_ptr.hbm [resolvable:$true] %s40
      %s42 = sshll.u32 [#allocation7], 4
      %s43 = int_to_ptr.vmem [resolvable:$true] %s42
      %45 = dma.hbm_to_vmem [thread:$0]  %s41, 128, %s43, [#allocation6]
    $region13: #{tpu_custom_call.1} parent=1 // pred_fallthru
      _
    // Predicated region
    $region14: #{tpu_custom_call.1} parent=1 // pred_check
      _
    $region15: #{tpu_custom_call.1} parent=1 // pred_check_branch
      %47 = sbr.rel (0) target = $region17
    $region16: #{tpu_custom_call.1} parent=1 // pred_region
      %49 = vsyncadd [#allocation9], 0
      %s51 = sshll.u32 %s3, 4
      %s52 = int_to_ptr.hbm [resolvable:$true] %s51
      %s53 = sshll.u32 [#allocation8], 4
      %s54 = int_to_ptr.vmem [resolvable:$true] %s53
      %56 = dma.hbm_to_vmem [thread:$0]  %s52, 128, %s54, [#allocation9]
    $region17: #{tpu_custom_call.1} parent=1 // pred_fallthru
      _
    // Predicated region
    $region18: #{tpu_custom_call.1} parent=1 // pred_check
      _
    $region19: #{tpu_custom_call.1} parent=1 // pred_check_branch
      %58 = sbr.rel (0) target = $region21
    $region20: #{tpu_custom_call.1} parent=1 // pred_region
      %60 = dma.done [#allocation3], 128
    $region21: #{tpu_custom_call.1} parent=1 // pred_fallthru
      _
    // Predicated region
    $region22: #{tpu_custom_call.1} parent=1 // pred_check
      _
    $region23: #{tpu_custom_call.1} parent=1 // pred_check_branch
      %62 = sbr.rel (0) target = $region25
    $region24: #{tpu_custom_call.1} parent=1 // pred_region
      %64 = dma.done [#allocation6], 128
    $region25: #{tpu_custom_call.1} parent=1 // pred_fallthru
      _
    // Predicated region
    $region26: #{tpu_custom_call.1} parent=1 // pred_check
      _
    $region27: #{tpu_custom_call.1} parent=1 // pred_check_branch
      %66 = sbr.rel (0) target = $region29
    $region28: #{tpu_custom_call.1} parent=1 // pred_region
      %68 = dma.done [#allocation6], 128
    $region29: #{tpu_custom_call.1} parent=1 // pred_fallthru
      _
    // Predicated region
    $region30: #{tpu_custom_call.1} parent=1 // pred_check
      _
    $region31: #{tpu_custom_call.1} parent=1 // pred_check_branch
      %70 = sbr.rel (0) target = $region33
    $region32: #{tpu_custom_call.1} parent=1 // pred_region
      %72 = dma.done [#allocation9], 128
    $region33: #{tpu_custom_call.1} parent=1 // pred_fallthru
      _
    %v73 = vld [vmem:[#allocation8] sm:$0xff]
    %v74 = vld [vmem:[#allocation2] sm:$0xff]
    %v75 = vld [vmem:[#allocation5] sm:$0xff]
    %v76 = vld [vmem:[#allocation7] sm:$0xff]
    %v77 = vlaneseq
    %v78 = vand.u32 %v77, 127
    %79 = vrot.lane.b32.xlu0 %v73, 1
    %v80 = vpop.permute.xlu0 %79
    %vm81 = vcmp.ge.s32.totalorder %v78, 1
    %v82 = vsel %vm81, 1, 0
    %vm83 = vcmp.eq.s32.totalorder %v82, 1
    %v84 = vsel %vm83, %v80, 0.0
    %v85 = vadd.f32 %v73, %v84
    %86 = vrot.lane.b32.xlu0 %v85, 2
    %v87 = vpop.permute.xlu0 %86
    %vm88 = vcmp.ge.s32.totalorder %v78, 2
    %v89 = vsel %vm88, 1, 0
    %vm90 = vcmp.eq.s32.totalorder %v89, 1
    %v91 = vsel %vm90, %v87, 0.0
    %v92 = vadd.f32 %v85, %v91
    %93 = vrot.lane.b32.xlu0 %v92, 4
    %v94 = vpop.permute.xlu0 %93
    %vm95 = vcmp.ge.s32.totalorder %v78, 4
    %v96 = vsel %vm95, 1, 0
    %vm97 = vcmp.eq.s32.totalorder %v96, 1
    %v98 = vsel %vm97, %v94, 0.0
    %v99 = vadd.f32 %v92, %v98
    %100 = vrot.lane.b32.xlu0 %v99, 8
    %v101 = vpop.permute.xlu0 %100
    %vm102 = vcmp.ge.s32.totalorder %v78, 8
    %v103 = vsel %vm102, 1, 0
    %vm104 = vcmp.eq.s32.totalorder %v103, 1
    %v105 = vsel %vm104, %v101, 0.0
    %v106 = vadd.f32 %v99, %v105
    %107 = vrot.lane.b32.xlu0 %v106, 16
    %v108 = vpop.permute.xlu0 %107
    %vm109 = vcmp.ge.s32.totalorder %v78, 16
    %v110 = vsel %vm109, 1, 0
    %vm111 = vcmp.eq.s32.totalorder %v110, 1
    %v112 = vsel %vm111, %v108, 0.0
    %v113 = vadd.f32 %v106, %v112
    %114 = vrot.lane.b32.xlu0 %v113, 32
    %v115 = vpop.permute.xlu0 %114
    %vm116 = vcmp.ge.s32.totalorder %v78, 32
    %v117 = vsel %vm116, 1, 0
    %vm118 = vcmp.eq.s32.totalorder %v117, 1
    %v119 = vsel %vm118, %v115, 0.0
    %v120 = vadd.f32 %v113, %v119
    %121 = vrot.lane.b32.xlu0 %v120, 64
    %v122 = vpop.permute.xlu0 %121
    %vm123 = vcmp.ge.s32.totalorder %v78, 64
    %v124 = vsel %vm123, 1, 0
    %vm125 = vcmp.eq.s32.totalorder %v124, 1
    %v126 = vsel %vm125, %v122, 0.0
    %v127 = vadd.f32 %v120, %v126
    %128 = vadd.xlane.f32.xlu0 %v73
    %v129 = vpop.xlane.xlu0 %128
    %v130 = vcvt.s32.f32 %v78
    %v131 = vadd.f32 %v130, 1.0
    %v132 = vmul.f32 %v127, 2.0
    %v133 = vadd.f32 %v131, %v129
    %v134 = vrcp.pop %v133
    %v135 = vmul.f32 %v132, %v134
    %v136 = vmul.f32 %v135, 1.1764706
    %v137 = vmul.f32 %v136, 1.442695
    %v138 = vpow.pop %v137
    %139 = vadd.xlane.f32.xlu0 %v138
    %v140 = vpop.xlane.xlu0 %139
    %v141 = vrcp.pop %v140
    %v142 = vmul.f32 %v138, %v141
    %v143 = vlog2.pop %v140
    %v144 = vmul.f32 %v143, 0.6931472
    %v145 = vsub.f32 %v136, %v144
    %v146 = vadd.f32 %v76, %v142
    %v147 = vmul.f32 %v146, 0.5
    %v148 = vlog2.pop %v147
    %v149 = vmul.f32 %v148, 0.6931472
    %v150 = vsub.f32 %v145, %v149
    %v151 = vmul.f32 %v142, %v150
    %vm152 = vcmp.gt.f32.partialorder %v76, 0.0
    %v153 = vlog2.pop %v76
    %v154 = vmul.f32 %v153, 0.6931472
    %v155 = vsub.f32 %v154, %v149
    %v156 = vmul.f32 %v76, %v155
    %v157 = vsel %vm152, %v156, 0.0
    %v158 = vadd.f32 %v151, %v157
    %159 = vadd.xlane.f32.xlu0 %v158
    %v160 = vpop.xlane.xlu0 %159
    %v161 = vrot.slane %v160, 4
    %v162 = vadd.f32 %v160, %v161
    %v163 = vrot.slane %v162, 2
    %v164 = vadd.f32 %v162, %v163
    %v165 = vrot.slane %v164, 1
    %v166 = vadd.f32 %v164, %v165
    %s167 = vtos %v166
    %vm168 = vcmp.eq.f32.partialorder %v73, 1.0
    %v169 = vsel %vm168, 1, 0
    %v170 = vcvt.s32.f32 %v169
    %v171 = vsub.f32 1.0, %v170
    %v172 = vmul.f32 %v170, %v75
    %173 = vadd.xlane.f32.xlu0 %v172
    %v174 = vpop.xlane.xlu0 %173
    %v175 = vrot.slane %v174, 4
    %v176 = vadd.f32 %v174, %v175
    %v177 = vrot.slane %v176, 2
    %v178 = vadd.f32 %v176, %v177
    %v179 = vrot.slane %v178, 1
    %v180 = vadd.f32 %v178, %v179
    %s181 = vtos %v180
    %v182 = vmul.f32 %v171, %v75
    %183 = vadd.xlane.f32.xlu0 %v182
    %v184 = vpop.xlane.xlu0 %183
    %v185 = vrot.slane %v184, 4
    %v186 = vadd.f32 %v184, %v185
    %v187 = vrot.slane %v186, 2
    %v188 = vadd.f32 %v186, %v187
    %v189 = vrot.slane %v188, 1
    %v190 = vadd.f32 %v188, %v189
    %s191 = vtos %v190
    %192 = vadd.xlane.f32.xlu0 %v170
    %v193 = vpop.xlane.xlu0 %192
    %v194 = vrot.slane %v193, 4
    %v195 = vadd.f32 %v193, %v194
    %v196 = vrot.slane %v195, 2
    %v197 = vadd.f32 %v195, %v196
    %v198 = vrot.slane %v197, 1
    %v199 = vadd.f32 %v197, %v198
    %s200 = vtos %v199
    %201 = vadd.xlane.f32.xlu0 %v171
    %v202 = vpop.xlane.xlu0 %201
    %v203 = vrot.slane %v202, 4
    %v204 = vadd.f32 %v202, %v203
    %v205 = vrot.slane %v204, 2
    %v206 = vadd.f32 %v204, %v205
    %v207 = vrot.slane %v206, 1
    %v208 = vadd.f32 %v206, %v207
    %s209 = vtos %v208
    %v210 = vlog2.pop %v74
    %v211 = vmul.f32 %v210, 0.6931472
    %v212 = vmax.f32 %v211, -100.0
    %v213 = vsub.f32 1.0, %v74
    %v214 = vlog2.pop %v213
    %v215 = vmul.f32 %v214, 0.6931472
    %v216 = vmax.f32 %v215, -100.0
    %v217 = vmul.f32 %v73, %v212
    %v218 = vsub.f32 1.0, %v73
    %v219 = vmul.f32 %v218, %v216
    %v220 = vadd.f32 %v217, %v219
    %221 = vadd.xlane.f32.xlu0 %v220
    %v222 = vpop.xlane.xlu0 %221
    %v223 = vrot.slane %v222, 4
    %v224 = vadd.f32 %v222, %v223
    %v225 = vrot.slane %v224, 2
    %v226 = vadd.f32 %v224, %v225
    %v227 = vrot.slane %v226, 1
    %v228 = vadd.f32 %v226, %v227
    %s229 = vtos %v228
    %s230 = ssub.f32 0.0, %s229
    %v231 = vlaneseq
    %v232 = vshrl.u32 %v231, 7
    %vm233 = vcmp.eq.s32.totalorder %v232, 0
    %vm234 = vcmp.eq.s32.totalorder %v78, 0
    %vm235 = vmand %vm233, %vm234
    %v236 = vstv %s167
    %v237 = vsel %vm235, %v236, 0.0
    %vm238 = vcmp.eq.s32.totalorder %v78, 1
    %vm239 = vmand %vm233, %vm238
    %v240 = vstv %s181
    %v241 = vsel %vm239, %v240, %v237
    %vm242 = vcmp.eq.s32.totalorder %v78, 2
    %vm243 = vmand %vm233, %vm242
    %v244 = vstv %s191
    %v245 = vsel %vm243, %v244, %v241
    %vm246 = vcmp.eq.s32.totalorder %v78, 3
    %vm247 = vmand %vm233, %vm246
    %v248 = vstv %s200
    %v249 = vsel %vm247, %v248, %v245
    %vm250 = vcmp.eq.s32.totalorder %v78, 4
    %vm251 = vmand %vm233, %vm250
    %v252 = vstv %s209
    %v253 = vsel %vm251, %v252, %v249
    %vm254 = vcmp.eq.s32.totalorder %v78, 5
    %vm255 = vmand %vm233, %vm254
    %v256 = vstv %s230
    %v257 = vsel %vm255, %v256, %v253
    %258 = vst [vmem:[#allocation10] sm:$0xff] %v257
    // Predicated region
    $region34: #{tpu_custom_call.1} parent=1 // pred_check
      _
    $region35: #{tpu_custom_call.1} parent=1 // pred_check_branch
      %260 = sbr.rel (0) target = $region37
    $region36: #{tpu_custom_call.1} parent=1 // pred_region
      %262 = vsyncadd [#allocation4], 0
      %s264 = sshll.u32 [#allocation10], 4
      %s265 = int_to_ptr.vmem [resolvable:$true] %s264
      %s266 = sshll.u32 %s4, 4
      %s267 = int_to_ptr.hbm [resolvable:$true] %s266
      %269 = dma.vmem_to_hbm [thread:$0]  %s265, 128, %s267, [#allocation4]
    $region37: #{tpu_custom_call.1} parent=1 // pred_fallthru
      _
    // Predicated region
    $region38: #{tpu_custom_call.1} parent=1 // pred_check
      _
    $region39: #{tpu_custom_call.1} parent=1 // pred_check_branch
      %271 = sbr.rel (0) target = $region41
    $region40: #{tpu_custom_call.1} parent=1 // pred_region
      %273 = dma.done [#allocation4], 128
    $region41: #{tpu_custom_call.1} parent=1 // pred_fallthru
      _
    %274 = vsyncpa [#allocation3], 1
    %275 = vsyncpa [#allocation6], 1
    %276 = vsyncpa [#allocation9], 1
    %277 = vsyncpa [#allocation4], 1

</llo_original>
